<compile_context>
chip_gen: v7x
topology: tpu7x:2x2x1
jax: 0.10.0
libtpu: 0.0.40
codegen_flags: <defaults>
</compile_context>

<pallas_src>
from functools import partial

import jax
import jax.numpy as jnp
from jax.experimental import pallas as pl
from jax.experimental.pallas import tpu as pltpu


def _round_up(x, m):
    return (x + m - 1) // m * m


def value_net_kernel(x_ref,
                     w1_ref, b1_ref,
                     w2_ref, b2_ref,
                     w3_ref, b3_ref,
                     w4_ref, b4_ref,
                     o_ref):
    """Fused 4-layer MLP forward for one (TM, K_pad) batch tile.

    x/w1/w2/w3 are bf16 (MXU inputs, f32 accumulation); biases, w4, layer-4
    math and all elementwise ops are f32.  The result is written as a
    lane-dense (1, TM) row.
    """
    x = x_ref[...]                                                    # (TM, K_pad) bf16

    h = jnp.dot(x, w1_ref[...], preferred_element_type=jnp.float32) + b1_ref[...]
    h = jnp.maximum(h, 0.0)

    h = jnp.dot(h.astype(jnp.bfloat16), w2_ref[...],
                preferred_element_type=jnp.float32) + b2_ref[...]
    h = jnp.maximum(h, 0.0)

    h = jnp.dot(h.astype(jnp.bfloat16), w3_ref[...],
                preferred_element_type=jnp.float32) + b3_ref[...]
    h = jnp.maximum(h, 0.0)

    # Layer 4 (H -> 1) in f32: contract the hidden dim of the 8-row padded w4
    # (real vector in row 0, zeros elsewhere) against h so the reduction lands
    # directly in lane-dense (batch-rows-as-lanes) layout.
    r = jax.lax.dot_general(w4_ref[...], h,
                            dimension_numbers=(((1,), (1,)), ((), ())),
                            preferred_element_type=jnp.float32)       # (8, TM)
    o_ref[0] = (r[0:1, :] + b4_ref[0, 0]).astype(o_ref.dtype)         # (1, TM)


def prepare_params(params):
    """One-time repack of f32 (in, out) params into the kernel's layout/dtypes."""
    state_dim, H = params["w1"].shape
    k_pad = _round_up(state_dim, 128)          # lane-align the layer-1 contraction dim

    w1 = jnp.zeros((k_pad, H), jnp.bfloat16).at[:state_dim, :].set(
        params["w1"].astype(jnp.bfloat16))
    # w4 stored as an 8-row block (real vector in row 0) so the layer-4 nt-dot
    # has an aligned sublane extent.
    w4 = jnp.pad(params["w4"].reshape(1, H).astype(jnp.float32), ((0, 7), (0, 0)))

    return {
        "w1": w1,
        "b1": params["b1"].reshape(1, H).astype(jnp.float32),
        "w2": params["w2"].astype(jnp.bfloat16),
        "b2": params["b2"].reshape(1, H).astype(jnp.float32),
        "w3": params["w3"].astype(jnp.bfloat16),
        "b3": params["b3"].reshape(1, H).astype(jnp.float32),
        "w4": w4,
        "b4": params["b4"].reshape(1, 1).astype(jnp.float32),
    }


@partial(jax.jit, static_argnames=("block_m",))
def value_network_forward(state, prep, *, block_m=1024):
    """state: (B, state_dim) f32.  prep: output of prepare_params.  Returns (B, 1) f32."""
    B, state_dim = state.shape
    k_pad, H = prep["w1"].shape

    # Even number of grid steps (so the "parallel" batch axis can shard across
    # both v7x TensorCores); rows per step rounded to 16 (bf16 sublane packing),
    # capped at block_m, chosen to minimize row padding.
    n_steps = max(2, pl.cdiv(B, block_m))
    n_steps += n_steps % 2
    tm = _round_up(pl.cdiv(B, n_steps), 16)
    b_pad = tm * n_steps

    # Pad + pre-cast the streamed input to bf16 (fused into this jit).
    # Padded rows produce relu(b1)-derived garbage; they are sliced off below.
    x = jnp.pad(state.astype(jnp.bfloat16),
                ((0, b_pad - B), (0, k_pad - state_dim)))

    def resident(shape):
        # Constant index_map -> fetched once, stays resident in VMEM.
        return pl.BlockSpec(shape, lambda i: (0, 0))

    out = pl.pallas_call(
        value_net_kernel,
        out_shape=jax.ShapeDtypeStruct((n_steps, 1, tm), jnp.float32),
        grid=(n_steps,),
        in_specs=[
            pl.BlockSpec((tm, k_pad), lambda i: (i, 0)),         # streamed batch tile
            resident((k_pad, H)), resident((1, H)),              # layer 1
            resident((H, H)),     resident((1, H)),              # layer 2
            resident((H, H)),     resident((1, H)),              # layer 3
            resident((8, H)),                                    # layer 4 weight (row 0)
            pl.BlockSpec(memory_space=pltpu.MemorySpace.SMEM),   # b4 scalar
        ],
        out_specs=pl.BlockSpec((1, 1, tm), lambda i: (i, 0, 0)), # lane-dense rows
        compiler_params=pltpu.CompilerParams(
            dimension_semantics=("parallel",),                   # megacore sharding
        ),
    )(x, prep["w1"], prep["b1"], prep["w2"], prep["b2"],
      prep["w3"], prep["b3"], prep["w4"], prep["b4"])

    # (n_steps, 1, tm) row-major == padded batch order; un-pad to (B, 1).
    return out.reshape(b_pad, 1)[:B]


def init_params(key, state_dim, hidden_dim, init_w=0.003):
    """Deterministic init mirroring nn.Linear defaults (+ small uniform on layer 4)."""
    ks = jax.random.split(key, 8)

    def linear_init(kw, kb, fan_in, fan_out):
        bound = 1.0 / jnp.sqrt(jnp.float32(fan_in))
        w = jax.random.uniform(kw, (fan_in, fan_out), jnp.float32, -bound, bound)
        b = jax.random.uniform(kb, (1, fan_out), jnp.float32, -bound, bound)
        return w, b

    w1, b1 = linear_init(ks[0], ks[1], state_dim, hidden_dim)
    w2, b2 = linear_init(ks[2], ks[3], hidden_dim, hidden_dim)
    w3, b3 = linear_init(ks[4], ks[5], hidden_dim, hidden_dim)
    # linear4: uniform_(-init_w, init_w) on both weight and bias.
    w4 = jax.random.uniform(ks[6], (hidden_dim, 1), jnp.float32, -init_w, init_w)
    b4 = jax.random.uniform(ks[7], (1, 1), jnp.float32, -init_w, init_w)

    return {"w1": w1, "b1": b1, "w2": w2, "b2": b2,
            "w3": w3, "b3": b3, "w4": w4, "b4": b4}


def reference_forward_f32(state, p):
    """Pure-f32 reference matching the original PyTorch module."""
    h = jnp.maximum(state @ p["w1"] + p["b1"], 0.0)
    h = jnp.maximum(h @ p["w2"] + p["b2"], 0.0)
    h = jnp.maximum(h @ p["w3"] + p["b3"], 0.0)
    return h @ p["w4"] + p["b4"]


def reference_forward_bf16(state, p):
    """Plain-JAX reference using the kernel's bf16-matmul / f32-accumulate recipe."""
    x = state.astype(jnp.bfloat16)
    h = jnp.maximum(jnp.dot(x, p["w1"].astype(jnp.bfloat16),
                            preferred_element_type=jnp.float32) + p["b1"], 0.0)
    h = jnp.maximum(jnp.dot(h.astype(jnp.bfloat16), p["w2"].astype(jnp.bfloat16),
                            preferred_element_type=jnp.float32) + p["b2"], 0.0)
    h = jnp.maximum(jnp.dot(h.astype(jnp.bfloat16), p["w3"].astype(jnp.bfloat16),
                            preferred_element_type=jnp.float32) + p["b3"], 0.0)
    return jnp.dot(h, p["w4"], preferred_element_type=jnp.float32) + p["b4"]


if __name__ == "__main__":
    key = jax.random.PRNGKey(0)
    k_params, k_small, k_large = jax.random.split(key, 3)

    state_dim = 43      # env.observation_space in the original script
    hidden_dim = 128    # small, lane-aligned stand-in for the module's 512

    params = init_params(k_params, state_dim, hidden_dim)
    prep = prepare_params(params)           # one-time repack, reused across calls

    # Tiny batch (2 rows -> two 16-row steps) and a larger batch that exercises
    # the multi-step grid + minimal row padding (300 -> 320 rows, 2 steps).
    for k_batch, batch in ((k_small, 2), (k_large, 300)):
        state = jax.random.normal(k_batch, (batch, state_dim), jnp.float32)

        out = jax.block_until_ready(value_network_forward(state, prep))
        assert out.shape == (batch, 1)

        ref_bf16 = reference_forward_bf16(state, params)
        ref_f32 = reference_forward_f32(state, params)
        assert jnp.allclose(out, ref_bf16, atol=2e-3, rtol=2e-3), \
            float(jnp.max(jnp.abs(out - ref_bf16)))
        assert jnp.allclose(out, ref_f32, atol=5e-2, rtol=5e-2), \
            float(jnp.max(jnp.abs(out - ref_f32)))

    print("KERNEL_OK")
</pallas_src>

<mosaic_0001>
module attributes {stable_mosaic.version = 11 : i64} {
  func.func @value_net_kernel(%arg0: i32, %arg1: memref<16x128xbf16, #tpu.memory_space<vmem>>, %arg2: memref<128x128xbf16, #tpu.memory_space<vmem>>, %arg3: memref<1x128xf32, #tpu.memory_space<vmem>>, %arg4: memref<128x128xbf16, #tpu.memory_space<vmem>>, %arg5: memref<1x128xf32, #tpu.memory_space<vmem>>, %arg6: memref<128x128xbf16, #tpu.memory_space<vmem>>, %arg7: memref<1x128xf32, #tpu.memory_space<vmem>>, %arg8: memref<8x128xf32, #tpu.memory_space<vmem>>, %arg9: memref<1x1xf32, #tpu.memory_space<smem>>, %arg10: memref<1x1x16xf32, #tpu.memory_space<vmem>>) attributes {dimension_semantics = [#tpu.dimension_semantics<parallel>], iteration_bounds = array<i64: 2>, scalar_prefetch = 0 : i64, scratch_operands = 0 : i64, tpu.core_type = #tpu.core_type<tc>, window_params = [{transform_indices = @transform_0, window_bounds = array<i64: 16, 128>}, {pipeline_mode = #tpu.pipeline_mode<synchronous>, transform_indices = @transform_1, window_bounds = array<i64: 128, 128>}, {pipeline_mode = #tpu.pipeline_mode<synchronous>, transform_indices = @transform_2, window_bounds = array<i64: 1, 128>}, {pipeline_mode = #tpu.pipeline_mode<synchronous>, transform_indices = @transform_3, window_bounds = array<i64: 128, 128>}, {pipeline_mode = #tpu.pipeline_mode<synchronous>, transform_indices = @transform_4, window_bounds = array<i64: 1, 128>}, {pipeline_mode = #tpu.pipeline_mode<synchronous>, transform_indices = @transform_5, window_bounds = array<i64: 128, 128>}, {pipeline_mode = #tpu.pipeline_mode<synchronous>, transform_indices = @transform_6, window_bounds = array<i64: 1, 128>}, {pipeline_mode = #tpu.pipeline_mode<synchronous>, transform_indices = @transform_7, window_bounds = array<i64: 8, 128>}, {transform_indices = @transform_8, window_bounds = array<i64: 1, 1>}, {transform_indices = @transform_9, window_bounds = array<i64: 1, 1, 16>}]} {
    %c0 = arith.constant 0 : index
    %c0_0 = arith.constant 0 : index
    %0 = vector.load %arg1[%c0, %c0_0] : memref<16x128xbf16, #tpu.memory_space<vmem>>, vector<16x128xbf16>
    %c0_1 = arith.constant 0 : index
    %c0_2 = arith.constant 0 : index
    %1 = vector.load %arg2[%c0_1, %c0_2] : memref<128x128xbf16, #tpu.memory_space<vmem>>, vector<128x128xbf16>
    %cst = arith.constant dense<0.000000e+00> : vector<16x128xf32>
    %2 = tpu.matmul %0, %1, %cst {dimension_numbers = #tpu.dot_dimension_numbers<[1], [0], [0], [1], [0, 0, 1, 1], [], []>} : vector<16x128xbf16>, vector<128x128xbf16>, vector<16x128xf32> -> vector<16x128xf32>
    %c0_3 = arith.constant 0 : index
    %c0_4 = arith.constant 0 : index
    %3 = vector.load %arg3[%c0_3, %c0_4] : memref<1x128xf32, #tpu.memory_space<vmem>>, vector<1x128xf32>
    %4 = vector.broadcast %3 : vector<1x128xf32> to vector<16x128xf32>
    %5 = arith.addf %2, %4 : vector<16x128xf32>
    %cst_5 = arith.constant 0.000000e+00 : f32
    %6 = vector.broadcast %cst_5 : f32 to vector<16x128xf32>
    %7 = arith.maximumf %5, %6 : vector<16x128xf32>
    %8 = arith.truncf %7 : vector<16x128xf32> to vector<16x128xbf16>
    %c0_6 = arith.constant 0 : index
    %c0_7 = arith.constant 0 : index
    %9 = vector.load %arg4[%c0_6, %c0_7] : memref<128x128xbf16, #tpu.memory_space<vmem>>, vector<128x128xbf16>
    %cst_8 = arith.constant dense<0.000000e+00> : vector<16x128xf32>
    %10 = tpu.matmul %8, %9, %cst_8 {dimension_numbers = #tpu.dot_dimension_numbers<[1], [0], [0], [1], [0, 0, 1, 1], [], []>} : vector<16x128xbf16>, vector<128x128xbf16>, vector<16x128xf32> -> vector<16x128xf32>
    %c0_9 = arith.constant 0 : index
    %c0_10 = arith.constant 0 : index
    %11 = vector.load %arg5[%c0_9, %c0_10] : memref<1x128xf32, #tpu.memory_space<vmem>>, vector<1x128xf32>
    %12 = vector.broadcast %11 : vector<1x128xf32> to vector<16x128xf32>
    %13 = arith.addf %10, %12 : vector<16x128xf32>
    %cst_11 = arith.constant 0.000000e+00 : f32
    %14 = vector.broadcast %cst_11 : f32 to vector<16x128xf32>
    %15 = arith.maximumf %13, %14 : vector<16x128xf32>
    %16 = arith.truncf %15 : vector<16x128xf32> to vector<16x128xbf16>
    %c0_12 = arith.constant 0 : index
    %c0_13 = arith.constant 0 : index
    %17 = vector.load %arg6[%c0_12, %c0_13] : memref<128x128xbf16, #tpu.memory_space<vmem>>, vector<128x128xbf16>
    %cst_14 = arith.constant dense<0.000000e+00> : vector<16x128xf32>
    %18 = tpu.matmul %16, %17, %cst_14 {dimension_numbers = #tpu.dot_dimension_numbers<[1], [0], [0], [1], [0, 0, 1, 1], [], []>} : vector<16x128xbf16>, vector<128x128xbf16>, vector<16x128xf32> -> vector<16x128xf32>
    %c0_15 = arith.constant 0 : index
    %c0_16 = arith.constant 0 : index
    %19 = vector.load %arg7[%c0_15, %c0_16] : memref<1x128xf32, #tpu.memory_space<vmem>>, vector<1x128xf32>
    %20 = vector.broadcast %19 : vector<1x128xf32> to vector<16x128xf32>
    %21 = arith.addf %18, %20 : vector<16x128xf32>
    %cst_17 = arith.constant 0.000000e+00 : f32
    %22 = vector.broadcast %cst_17 : f32 to vector<16x128xf32>
    %23 = arith.maximumf %21, %22 : vector<16x128xf32>
    %c0_18 = arith.constant 0 : index
    %c0_19 = arith.constant 0 : index
    %24 = vector.load %arg8[%c0_18, %c0_19] : memref<8x128xf32, #tpu.memory_space<vmem>>, vector<8x128xf32>
    %cst_20 = arith.constant dense<0.000000e+00> : vector<8x16xf32>
    %25 = tpu.matmul %24, %23, %cst_20 {dimension_numbers = #tpu.dot_dimension_numbers<[1], [1], [0], [0], [0, 0, 1, 0], [], []>} : vector<8x128xf32>, vector<16x128xf32>, vector<8x16xf32> -> vector<8x16xf32>
    %26 = vector.extract_strided_slice %25 {offsets = [0, 0], sizes = [1, 16], strides = [1, 1]} : vector<8x16xf32> to vector<1x16xf32>
    %c0_21 = arith.constant 0 : index
    %c0_22 = arith.constant 0 : index
    %27 = memref.load %arg9[%c0_21, %c0_22] : memref<1x1xf32, #tpu.memory_space<smem>>
    %28 = vector.broadcast %27 : f32 to vector<1x16xf32>
    %29 = arith.addf %26, %28 : vector<1x16xf32>
    %c0_23 = arith.constant 0 : index
    %c0_24 = arith.constant 0 : index
    %c0_25 = arith.constant 0 : index
    %30 = vector.load %arg10[%c0_23, %c0_24, %c0_25] : memref<1x1x16xf32, #tpu.memory_space<vmem>>, vector<1x1x16xf32>
    %31 = vector.shape_cast %30 : vector<1x1x16xf32> to vector<1x16xf32>
    %32 = vector.shape_cast %29 : vector<1x16xf32> to vector<1x1x16xf32>
    tpu.vector_store %arg10[%c0_23, %c0_24, %c0_25], %32 {strides = array<i32>} : memref<1x1x16xf32, #tpu.memory_space<vmem>>, vector<1x1x16xf32>,
    return
  }
  func.func @transform_0(%arg0: i32) -> (i32, i32) {
    %c0_i32 = arith.constant 0 : i32
    %c0_i32_0 = arith.constant 0 : i32
    return %arg0, %c0_i32 : i32, i32
  }
  func.func @transform_1(%arg0: i32) -> (i32, i32) {
    %c0_i32 = arith.constant 0 : i32
    %c0_i32_0 = arith.constant 0 : i32
    %c0_i32_1 = arith.constant 0 : i32
    return %c0_i32, %c0_i32_0 : i32, i32
  }
  func.func @transform_2(%arg0: i32) -> (i32, i32) {
    %c0_i32 = arith.constant 0 : i32
    %c0_i32_0 = arith.constant 0 : i32
    %c0_i32_1 = arith.constant 0 : i32
    return %c0_i32, %c0_i32_0 : i32, i32
  }
  func.func @transform_3(%arg0: i32) -> (i32, i32) {
    %c0_i32 = arith.constant 0 : i32
    %c0_i32_0 = arith.constant 0 : i32
    %c0_i32_1 = arith.constant 0 : i32
    return %c0_i32, %c0_i32_0 : i32, i32
  }
  func.func @transform_4(%arg0: i32) -> (i32, i32) {
    %c0_i32 = arith.constant 0 : i32
    %c0_i32_0 = arith.constant 0 : i32
    %c0_i32_1 = arith.constant 0 : i32
    return %c0_i32, %c0_i32_0 : i32, i32
  }
  func.func @transform_5(%arg0: i32) -> (i32, i32) {
    %c0_i32 = arith.constant 0 : i32
    %c0_i32_0 = arith.constant 0 : i32
    %c0_i32_1 = arith.constant 0 : i32
    return %c0_i32, %c0_i32_0 : i32, i32
  }
  func.func @transform_6(%arg0: i32) -> (i32, i32) {
    %c0_i32 = arith.constant 0 : i32
    %c0_i32_0 = arith.constant 0 : i32
    %c0_i32_1 = arith.constant 0 : i32
    return %c0_i32, %c0_i32_0 : i32, i32
  }
  func.func @transform_7(%arg0: i32) -> (i32, i32) {
    %c0_i32 = arith.constant 0 : i32
    %c0_i32_0 = arith.constant 0 : i32
    %c0_i32_1 = arith.constant 0 : i32
    return %c0_i32, %c0_i32_0 : i32, i32
  }
  func.func @transform_8(%arg0: i32) -> (i32, i32) {
    %c0_i32 = arith.constant 0 : i32
    %c0_i32_0 = arith.constant 0 : i32
    %c0_i32_1 = arith.constant 0 : i32
    return %c0_i32, %c0_i32_0 : i32, i32
  }
  func.func @transform_9(%arg0: i32) -> (i32, i32, i32) {
    %c0_i32 = arith.constant 0 : i32
    %c0_i32_0 = arith.constant 0 : i32
    %c0_i32_1 = arith.constant 0 : i32
    return %arg0, %c0_i32, %c0_i32_0 : i32, i32, i32
  }
}

</mosaic_0001>

<llo_original>
// kernel: value_network_forward.1
$region0: #{value_network_forward.1}
  #allocation0 [shape = 'u32[]', space=smem, size = 0x4, offset = 0x4, fixed_abs, tag = 'smem constant byte address 0x4 - core index']
  #allocation1 [shape = 'u32[144,128]{1,0:T(1,128)}', space=vmem, size = 0x12000, scoped, tag = 'internal scratch']
  #allocation2 [shape = 'f32[1,1]{1,0:T(1,128)S(6)}', space=smem, size = 0x200, scoped, tag = 'scoped memory for value_network_forward.1']
  %s0 = inlined_call_operand.vmem [shape: bf16[32,128], index: 0, kind: input, shape index: {}]
  %s1 = inlined_call_operand.hbm [shape: bf16[128,128], index: 1, kind: input, shape index: {}]
  %s2 = inlined_call_operand.vmem [shape: f32[1,128], index: 2, kind: input, shape index: {}]
  %s3 = inlined_call_operand.hbm [shape: bf16[128,128], index: 3, kind: input, shape index: {}]
  %s4 = inlined_call_operand.vmem [shape: f32[1,128], index: 4, kind: input, shape index: {}]
  %s5 = inlined_call_operand.hbm [shape: bf16[128,128], index: 5, kind: input, shape index: {}]
  %s6 = inlined_call_operand.vmem [shape: f32[1,128], index: 6, kind: input, shape index: {}]
  %s7 = inlined_call_operand.vmem [shape: f32[8,128], index: 7, kind: input, shape index: {}]
  %s8 = inlined_call_operand.<no memory space> [shape: f32[1,1], index: 8, kind: input, shape index: {}]
  %s9 = inlined_call_operand.vmem [shape: f32[2,1,16], index: 9, kind: output, shape index: {}]
  %s10 = sld [smem:[#allocation0]]
  $region81: #{value_network_forward.1} parent=0
    _
  %s12 = ssub.s32 1, %s10
  %s13 = scalar_select 0, %s12, %s10
  %14 = sst [smem:[#allocation2]] %s8
  $region1: #{value_network_forward.1} parent=0
    #allocation3 [shape = 'u8[32768]{0}', space=vmem, size = 0x8000, scoped, tag = 'input window, operand 1, single buffered']
    #allocation4 [shape = 's32[2]{0}', space=sflag, size = 0x8, scoped, tag = 'scoped memory for value_network_forward.1']
    #allocation5 [shape = 'u8[32768]{0}', space=vmem, size = 0x8000, scoped, tag = 'input window, operand 3, single buffered']
    #allocation6 [shape = 's32[1]{0}', space=sflag, size = 0x4, scoped, tag = 'scoped memory for value_network_forward.1']
    #allocation7 [shape = 'u8[32768]{0}', space=vmem, size = 0x8000, scoped, tag = 'input window, operand 5, single buffered']
    %15 = vsyncpa [#allocation4], 0
    %16 = vsyncpa [#allocation6], 0
    loop: start=0, step=1, limit=4
    $region2: #{value_network_forward.1} parent=1 // loop_pre_header
      _
    $region3: #{value_network_forward.1} parent=1 // loop_header
      %s18 = sphi 0, %s22
      %p19 = scmp.ge.s32.totalorder %s18, 4
      %s28 = sphi 0, %s30
      %s31 = sphi 0, %s28
      %s32 = sphi 0, %s31
      %s48 = sphi 0, %s32
      %s52 = sphi 0, %s52
      %s54 = sphi 0, %s52
      %s55 = sphi 0, %s54
      %s69 = sphi 0, %s55
      %s73 = sphi 0, %s73
      %s75 = sphi 0, %s73
      %s76 = sphi 0, %s75
      %s90 = sphi 0, %s76
      %s94 = sphi 0, %s94
      %s96 = sphi 0, %s94
      %s97 = sphi 0, %s96
      %s111 = sphi 0, %s97
      %s115 = sphi 0, %s115
      %s117 = sphi 0, %s115
      %s118 = sphi 0, %s117
      %s132 = sphi 0, %s118
      %s136 = sphi 0, %s136
      %s138 = sphi 0, %s136
      %s139 = sphi 0, %s138
      %s153 = sphi 0, %s139
      %s157 = sphi 0, %s157
      %s159 = sphi 0, %s157
      %s160 = sphi 0, %s159
      %s174 = sphi 0, %s160
      %s178 = sphi 0, %s178
      %s180 = sphi 0, %s178
      %s181 = sphi 0, %s180
      %s195 = sphi 0, %s181
      %s199 = sphi 0, %s199
      %s201 = sphi 0, %s199
      %s202 = sphi 0, %s201
      %s216 = sphi 0, %s202
      %s222 = sphi 0, %s224
      %s225 = sphi 0, %s222
      %s226 = sphi 0, %s225
      %s242 = sphi 0, %s226
    $region4: #{value_network_forward.1} parent=1 // loop_header_branch
      %21 = sbr.rel (%p19) target = $region8
    $region5: #{value_network_forward.1} parent=1 // loop_body
      %s23 = ssub.s32 %s18, 1
      %s24 = ssub.s32 %s18, 2
      %s25 = sadd.s32 %s18, 1
      %s26 = ssub.s32 %s18, %s25
      %p27 = scmp.eq.s32.totalorder %s26, 0
      %s29 = sadd.s32 %s28, 1
      %s30 = scalar_select %p27, %s28, %s29
      %p33 = pneg %p27
      %p34 = scmp.eq.s32.totalorder %s18, 1
      %p35 = por %p33, %p34
      %p36 = scmp.ne.s32.totalorder %s28, %s31
      %p37 = scmp.eq.s32.totalorder %s18, 0
      %p38 = por %p36, %p37
      %p39 = scmp.ne.s32.totalorder %s28, %s31
      %p40 = scmp.eq.s32.totalorder %s23, 1
      %p41 = por %p39, %p40
      %p42 = scmp.ne.s32.totalorder %s31, %s32
      %p43 = scmp.eq.s32.totalorder %s23, 0
      %p44 = por %p42, %p43
      %p45 = scmp.ne.s32.totalorder %s31, %s32
      %p46 = scmp.eq.s32.totalorder %s24, 1
      %p47 = por %p45, %p46
      %p49 = scmp.ne.s32.totalorder %s32, %s48
      %p50 = scmp.eq.s32.totalorder %s24, 0
      %p51 = por %p49, %p50
      %s53 = sadd.s32 %s52, 1
      %p56 = scmp.eq.s32.totalorder %s18, 1
      %p57 = scmp.ne.s32.totalorder %s52, %s54
      %p58 = scmp.eq.s32.totalorder %s18, 0
      %p59 = por %p57, %p58
      %p60 = scmp.ne.s32.totalorder %s52, %s54
      %p61 = scmp.eq.s32.totalorder %s23, 1
      %p62 = por %p60, %p61
      %p63 = scmp.ne.s32.totalorder %s54, %s55
      %p64 = scmp.eq.s32.totalorder %s23, 0
      %p65 = por %p63, %p64
      %p66 = scmp.ne.s32.totalorder %s54, %s55
      %p67 = scmp.eq.s32.totalorder %s24, 1
      %p68 = por %p66, %p67
      %p70 = scmp.ne.s32.totalorder %s55, %s69
      %p71 = scmp.eq.s32.totalorder %s24, 0
      %p72 = por %p70, %p71
      %s74 = sadd.s32 %s73, 1
      %p77 = scmp.eq.s32.totalorder %s18, 1
      %p78 = scmp.ne.s32.totalorder %s73, %s75
      %p79 = scmp.eq.s32.totalorder %s18, 0
      %p80 = por %p78, %p79
      %p81 = scmp.ne.s32.totalorder %s73, %s75
      %p82 = scmp.eq.s32.totalorder %s23, 1
      %p83 = por %p81, %p82
      %p84 = scmp.ne.s32.totalorder %s75, %s76
      %p85 = scmp.eq.s32.totalorder %s23, 0
      %p86 = por %p84, %p85
      %p87 = scmp.ne.s32.totalorder %s75, %s76
      %p88 = scmp.eq.s32.totalorder %s24, 1
      %p89 = por %p87, %p88
      %p91 = scmp.ne.s32.totalorder %s76, %s90
      %p92 = scmp.eq.s32.totalorder %s24, 0
      %p93 = por %p91, %p92
      %s95 = sadd.s32 %s94, 1
      %p98 = scmp.eq.s32.totalorder %s18, 1
      %p99 = scmp.ne.s32.totalorder %s94, %s96
      %p100 = scmp.eq.s32.totalorder %s18, 0
      %p101 = por %p99, %p100
      %p102 = scmp.ne.s32.totalorder %s94, %s96
      %p103 = scmp.eq.s32.totalorder %s23, 1
      %p104 = por %p102, %p103
      %p105 = scmp.ne.s32.totalorder %s96, %s97
      %p106 = scmp.eq.s32.totalorder %s23, 0
      %p107 = por %p105, %p106
      %p108 = scmp.ne.s32.totalorder %s96, %s97
      %p109 = scmp.eq.s32.totalorder %s24, 1
      %p110 = por %p108, %p109
      %p112 = scmp.ne.s32.totalorder %s97, %s111
      %p113 = scmp.eq.s32.totalorder %s24, 0
      %p114 = por %p112, %p113
      %s116 = sadd.s32 %s115, 1
      %p119 = scmp.eq.s32.totalorder %s18, 1
      %p120 = scmp.ne.s32.totalorder %s115, %s117
      %p121 = scmp.eq.s32.totalorder %s18, 0
      %p122 = por %p120, %p121
      %p123 = scmp.ne.s32.totalorder %s115, %s117
      %p124 = scmp.eq.s32.totalorder %s23, 1
      %p125 = por %p123, %p124
      %p126 = scmp.ne.s32.totalorder %s117, %s118
      %p127 = scmp.eq.s32.totalorder %s23, 0
      %p128 = por %p126, %p127
      %p129 = scmp.ne.s32.totalorder %s117, %s118
      %p130 = scmp.eq.s32.totalorder %s24, 1
      %p131 = por %p129, %p130
      %p133 = scmp.ne.s32.totalorder %s118, %s132
      %p134 = scmp.eq.s32.totalorder %s24, 0
      %p135 = por %p133, %p134
      %s137 = sadd.s32 %s136, 1
      %p140 = scmp.eq.s32.totalorder %s18, 1
      %p141 = scmp.ne.s32.totalorder %s136, %s138
      %p142 = scmp.eq.s32.totalorder %s18, 0
      %p143 = por %p141, %p142
      %p144 = scmp.ne.s32.totalorder %s136, %s138
      %p145 = scmp.eq.s32.totalorder %s23, 1
      %p146 = por %p144, %p145
      %p147 = scmp.ne.s32.totalorder %s138, %s139
      %p148 = scmp.eq.s32.totalorder %s23, 0
      %p149 = por %p147, %p148
      %p150 = scmp.ne.s32.totalorder %s138, %s139
      %p151 = scmp.eq.s32.totalorder %s24, 1
      %p152 = por %p150, %p151
      %p154 = scmp.ne.s32.totalorder %s139, %s153
      %p155 = scmp.eq.s32.totalorder %s24, 0
      %p156 = por %p154, %p155
      %s158 = sadd.s32 %s157, 1
      %p161 = scmp.eq.s32.totalorder %s18, 1
      %p162 = scmp.ne.s32.totalorder %s157, %s159
      %p163 = scmp.eq.s32.totalorder %s18, 0
      %p164 = por %p162, %p163
      %p165 = scmp.ne.s32.totalorder %s157, %s159
      %p166 = scmp.eq.s32.totalorder %s23, 1
      %p167 = por %p165, %p166
      %p168 = scmp.ne.s32.totalorder %s159, %s160
      %p169 = scmp.eq.s32.totalorder %s23, 0
      %p170 = por %p168, %p169
      %p171 = scmp.ne.s32.totalorder %s159, %s160
      %p172 = scmp.eq.s32.totalorder %s24, 1
      %p173 = por %p171, %p172
      %p175 = scmp.ne.s32.totalorder %s160, %s174
      %p176 = scmp.eq.s32.totalorder %s24, 0
      %p177 = por %p175, %p176
      %s179 = sadd.s32 %s178, 1
      %p182 = scmp.eq.s32.totalorder %s18, 1
      %p183 = scmp.ne.s32.totalorder %s178, %s180
      %p184 = scmp.eq.s32.totalorder %s18, 0
      %p185 = por %p183, %p184
      %p186 = scmp.ne.s32.totalorder %s178, %s180
      %p187 = scmp.eq.s32.totalorder %s23, 1
      %p188 = por %p186, %p187
      %p189 = scmp.ne.s32.totalorder %s180, %s181
      %p190 = scmp.eq.s32.totalorder %s23, 0
      %p191 = por %p189, %p190
      %p192 = scmp.ne.s32.totalorder %s180, %s181
      %p193 = scmp.eq.s32.totalorder %s24, 1
      %p194 = por %p192, %p193
      %p196 = scmp.ne.s32.totalorder %s181, %s195
      %p197 = scmp.eq.s32.totalorder %s24, 0
      %p198 = por %p196, %p197
      %s200 = sadd.s32 %s199, 1
      %p203 = scmp.eq.s32.totalorder %s18, 1
      %p204 = scmp.ne.s32.totalorder %s199, %s201
      %p205 = scmp.eq.s32.totalorder %s18, 0
      %p206 = por %p204, %p205
      %p207 = scmp.ne.s32.totalorder %s199, %s201
      %p208 = scmp.eq.s32.totalorder %s23, 1
      %p209 = por %p207, %p208
      %p210 = scmp.ne.s32.totalorder %s201, %s202
      %p211 = scmp.eq.s32.totalorder %s23, 0
      %p212 = por %p210, %p211
      %p213 = scmp.ne.s32.totalorder %s201, %s202
      %p214 = scmp.eq.s32.totalorder %s24, 1
      %p215 = por %p213, %p214
      %p217 = scmp.ne.s32.totalorder %s202, %s216
      %p218 = scmp.eq.s32.totalorder %s24, 0
      %p219 = por %p217, %p218
      %s220 = ssub.s32 %s18, %s25
      %p221 = scmp.eq.s32.totalorder %s220, 0
      %s223 = sadd.s32 %s222, 1
      %s224 = scalar_select %p221, %s222, %s223
      %p227 = pneg %p221
      %p228 = scmp.eq.s32.totalorder %s18, 1
      %p229 = por %p227, %p228
      %p230 = scmp.ne.s32.totalorder %s222, %s225
      %p231 = scmp.eq.s32.totalorder %s18, 0
      %p232 = por %p230, %p231
      %p233 = scmp.ne.s32.totalorder %s222, %s225
      %p234 = scmp.eq.s32.totalorder %s23, 1
      %p235 = por %p233, %p234
      %p236 = scmp.ne.s32.totalorder %s225, %s226
      %p237 = scmp.eq.s32.totalorder %s23, 0
      %p238 = por %p236, %p237
      %p239 = scmp.ne.s32.totalorder %s225, %s226
      %p240 = scmp.eq.s32.totalorder %s24, 1
      %p241 = por %p239, %p240
      %p243 = scmp.ne.s32.totalorder %s226, %s242
      %p244 = scmp.eq.s32.totalorder %s24, 0
      %p245 = por %p243, %p244
      %p246 = scmp.le.s32.totalorder 1, %s18
      %p247 = scmp.lt.s32.totalorder %s18, 3
      %p248 = pnand %p246, %p247
      %p249 = pneg %p248
      // Predicated region
      $region9: #{value_network_forward.1} parent=5 // pred_check
        _
      $region10: #{value_network_forward.1} parent=5 // pred_check_branch
        %251 = sbr.rel (%p248) target = $region12
      $region11: #{value_network_forward.1} parent=5 // pred_region
        %s252 = ssub.s32 %s18, 1
        // Predicated region
        $region13: #{value_network_forward.1} parent=11 // pred_check
          %p253 = pneg %p65
        $region14: #{value_network_forward.1} parent=11 // pred_check_branch
          %255 = sbr.rel (%p253) target = $region16
        $region15: #{value_network_forward.1} parent=11 // pred_region
          %s257 = ssub.s32 1024, 1024
          %258 = vsyncadd [#allocation4], %s257
          %s259 = sshll.u32 [#allocation3], 4
          %s260 = int_to_ptr.vmem [resolvable:$true] %s259
          %265 = dma.hbm_to_vmem [thread:$0]  %s1, 1024, %s260, [#allocation4], 64, 64, 4
        $region16: #{value_network_forward.1} parent=11 // pred_fallthru
          _
        // Predicated region
        $region17: #{value_network_forward.1} parent=11 // pred_check
          %p266 = pneg %p86
        $region18: #{value_network_forward.1} parent=11 // pred_check_branch
          %268 = sbr.rel (%p266) target = $region20
        $region19: #{value_network_forward.1} parent=11 // pred_region
          _
        $region20: #{value_network_forward.1} parent=11 // pred_fallthru
          _
        // Predicated region
        $region21: #{value_network_forward.1} parent=11 // pred_check
          %p269 = pneg %p107
        $region22: #{value_network_forward.1} parent=11 // pred_check_branch
          %271 = sbr.rel (%p269) target = $region24
        $region23: #{value_network_forward.1} parent=11 // pred_region
          %s273 = ssub.s32 1024, 1024
          %274 = vsyncadd [#allocation6], %s273
          %s275 = sshll.u32 [#allocation5], 4
          %s276 = int_to_ptr.vmem [resolvable:$true] %s275
          %281 = dma.hbm_to_vmem [thread:$0]  %s3, 1024, %s276, [#allocation6], 64, 64, 4
        $region24: #{value_network_forward.1} parent=11 // pred_fallthru
          _
        // Predicated region
        $region25: #{value_network_forward.1} parent=11 // pred_check
          %p282 = pneg %p128
        $region26: #{value_network_forward.1} parent=11 // pred_check_branch
          %284 = sbr.rel (%p282) target = $region28
        $region27: #{value_network_forward.1} parent=11 // pred_region
          _
        $region28: #{value_network_forward.1} parent=11 // pred_fallthru
          _
        // Predicated region
        $region29: #{value_network_forward.1} parent=11 // pred_check
          %p285 = pneg %p149
        $region30: #{value_network_forward.1} parent=11 // pred_check_branch
          %287 = sbr.rel (%p285) target = $region32
        $region31: #{value_network_forward.1} parent=11 // pred_region
          %s289 = ssub.s32 1024, 1024
          %290 = vsyncadd [#allocation6], %s289
          %s291 = sshll.u32 [#allocation7], 4
          %s292 = int_to_ptr.vmem [resolvable:$true] %s291
          %297 = dma.hbm_to_vmem [thread:$0]  %s5, 1024, %s292, [#allocation6], 64, 64, 4
        $region32: #{value_network_forward.1} parent=11 // pred_fallthru
          _
        // Predicated region
        $region33: #{value_network_forward.1} parent=11 // pred_check
          %p298 = pneg %p170
        $region34: #{value_network_forward.1} parent=11 // pred_check_branch
          %300 = sbr.rel (%p298) target = $region36
        $region35: #{value_network_forward.1} parent=11 // pred_region
          _
        $region36: #{value_network_forward.1} parent=11 // pred_fallthru
          _
        // Predicated region
        $region37: #{value_network_forward.1} parent=11 // pred_check
          %p301 = pneg %p191
        $region38: #{value_network_forward.1} parent=11 // pred_check_branch
          %303 = sbr.rel (%p301) target = $region40
        $region39: #{value_network_forward.1} parent=11 // pred_region
          _
        $region40: #{value_network_forward.1} parent=11 // pred_fallthru
          _
        // Predicated region
        $region41: #{value_network_forward.1} parent=11 // pred_check
          %p304 = pneg %p212
        $region42: #{value_network_forward.1} parent=11 // pred_check_branch
          %306 = sbr.rel (%p304) target = $region44
        $region43: #{value_network_forward.1} parent=11 // pred_region
          _
        $region44: #{value_network_forward.1} parent=11 // pred_fallthru
          _
      $region12: #{value_network_forward.1} parent=5 // pred_fallthru
        _
      %p307 = scmp.lt.s32.totalorder %s18, 2
      // Predicated region
      $region45: #{value_network_forward.1} parent=5 // pred_check
        %p308 = pneg %p307
      $region46: #{value_network_forward.1} parent=5 // pred_check_branch
        %310 = sbr.rel (%p308) target = $region48
      $region47: #{value_network_forward.1} parent=5 // pred_region
        // Predicated region
        $region49: #{value_network_forward.1} parent=47 // pred_check
          %p311 = pneg %p38
        $region50: #{value_network_forward.1} parent=47 // pred_check_branch
          %313 = sbr.rel (%p311) target = $region52
        $region51: #{value_network_forward.1} parent=47 // pred_region
          %s314 = smul.u32 2, %s18
          %p315 = scmp.lt.s32.totalorder %s314, 3
          %s316 = scalar_select %p315, %s314, 3
          %s317 = smul.addr %s316, 4
          %s318 = scalar_lea.vmem %s0, %s317
          %s319 = smul.u32 2, %s18
        $region52: #{value_network_forward.1} parent=47 // pred_fallthru
          _
      $region48: #{value_network_forward.1} parent=5 // pred_fallthru
        _
      %p320 = scmp.le.s32.totalorder 1, %s18
      %p321 = scmp.lt.s32.totalorder %s18, 3
      %p322 = pnand %p320, %p321
      %p323 = pneg %p322
      // Predicated region
      $region53: #{value_network_forward.1} parent=5 // pred_check
        _
      $region54: #{value_network_forward.1} parent=5 // pred_check_branch
        %325 = sbr.rel (%p322) target = $region56
      $region55: #{value_network_forward.1} parent=5 // pred_region
        %s326 = ssub.s32 %s18, 1
        // Predicated region
        $region57: #{value_network_forward.1} parent=55 // pred_check
          %p327 = pneg %p65
        $region58: #{value_network_forward.1} parent=55 // pred_check_branch
          %329 = sbr.rel (%p327) target = $region60
        $region59: #{value_network_forward.1} parent=55 // pred_region
          %330 = dma.done [#allocation4], 1024
        $region60: #{value_network_forward.1} parent=55 // pred_fallthru
          _
        // Predicated region
        $region61: #{value_network_forward.1} parent=55 // pred_check
          %p331 = pneg %p107
        $region62: #{value_network_forward.1} parent=55 // pred_check_branch
          %333 = sbr.rel (%p331) target = $region64
        $region63: #{value_network_forward.1} parent=55 // pred_region
          %334 = dma.done [#allocation6], 1024
        $region64: #{value_network_forward.1} parent=55 // pred_fallthru
          _
        // Predicated region
        $region65: #{value_network_forward.1} parent=55 // pred_check
          %p335 = pneg %p149
        $region66: #{value_network_forward.1} parent=55 // pred_check_branch
          %337 = sbr.rel (%p335) target = $region68
        $region67: #{value_network_forward.1} parent=55 // pred_region
          %338 = dma.done [#allocation6], 1024
        $region68: #{value_network_forward.1} parent=55 // pred_fallthru
          _
        %s339 = smul.u32 2, %s23
        %p340 = scmp.lt.s32.totalorder %s339, 3
        %s341 = scalar_select %p340, %s339, 3
        %s342 = smul.addr %s341, 4
        %s343 = scalar_lea.vmem %s0, %s342
        %p344 = pneg %p44
        %p345 = pneg %p41
        %p346 = pneg %p65
        %p347 = pneg %p62
        %p348 = pneg %p86
        %p349 = pneg %p83
        %p350 = pneg %p107
        %p351 = pneg %p104
        %p352 = pneg %p128
        %p353 = pneg %p125
        %p354 = pneg %p149
        %p355 = pneg %p146
        %p356 = pneg %p170
        %p357 = pneg %p167
        %p358 = pneg %p191
        %p359 = pneg %p188
        %p360 = pneg %p212
        %p361 = pneg %p209
        %p362 = pneg %p238
        %p363 = pneg %p235
        %p364 = scmp.lt.s32.totalorder %s23, 1
        %s365 = scalar_select %p364, %s23, 1
        %s366 = scalar_lea.vmem %s9, %s365
        %s367 = smul.u32 2, %s23
        %p368 = scmp.lt.s32.totalorder %s367, 3
        %s369 = scalar_select %p368, %s367, 3
        %s370 = smul.addr %s369, 4
        %s371 = scalar_lea.vmem %s0, %s370
        %s372 = smul.u32 2, %s23
        %p373 = scmp.lt.s32.totalorder %s23, 1
        %s374 = scalar_select %p373, %s23, 1
        %s375 = scalar_lea.vmem %s9, %s374
        %v377 = vld [vmem:[%s371] sm:$0xf]
        %v378 = vld [vmem:[%s371 + $0x4] sm:$0xf]
        %v379 = vld [vmem:[#allocation3] sm:$0xf]
        %v380 = vld [vmem:[#allocation3 + $0x4] sm:$0xf]
        %v381 = vld [vmem:[#allocation3 + $0x8] sm:$0xf]
        %v382 = vld [vmem:[#allocation3 + $0xc] sm:$0xf]
        %v383 = vld [vmem:[#allocation3 + $0x10] sm:$0xf]
        %v384 = vld [vmem:[#allocation3 + $0x14] sm:$0xf]
        %v385 = vld [vmem:[#allocation3 + $0x18] sm:$0xf]
        %v386 = vld [vmem:[#allocation3 + $0x1c] sm:$0xf]
        %v387 = vld [vmem:[#allocation3 + $0x20] sm:$0xf]
        %v388 = vld [vmem:[#allocation3 + $0x24] sm:$0xf]
        %v389 = vld [vmem:[#allocation3 + $0x28] sm:$0xf]
        %v390 = vld [vmem:[#allocation3 + $0x2c] sm:$0xf]
        %v391 = vld [vmem:[#allocation3 + $0x30] sm:$0xf]
        %v392 = vld [vmem:[#allocation3 + $0x34] sm:$0xf]
        %v393 = vld [vmem:[#allocation3 + $0x38] sm:$0xf]
        %v394 = vld [vmem:[#allocation3 + $0x3c] sm:$0xf]
        %v395 = vld [vmem:[%s2] sm:$0x1]
        %v397 = vlaneseq
        %v398 = vshrl.u32 %v397, 7
        %v399 = vsub.s32 0, %v398
        %v400 = vrot.slane %v395, %v399
        %v404 = vunpack.c.l.b16 %v377
        %v405 = vunpack.c.l.b16 %v378
        %v406 = vpack.c.b16 %v405, %v404
        %v424 = vunpack.c.l.b16 %v379
        %v425 = vunpack.c.l.b16 %v380
        %v426 = vunpack.c.l.b16 %v381
        %v427 = vunpack.c.l.b16 %v382
        %v428 = vunpack.c.l.b16 %v383
        %v429 = vunpack.c.l.b16 %v384
        %v430 = vunpack.c.l.b16 %v385
        %v431 = vunpack.c.l.b16 %v386
        %v432 = vunpack.c.l.b16 %v387
        %v433 = vunpack.c.l.b16 %v388
        %v434 = vunpack.c.l.b16 %v389
        %v435 = vunpack.c.l.b16 %v390
        %v436 = vunpack.c.l.b16 %v391
        %v437 = vunpack.c.l.b16 %v392
        %v438 = vunpack.c.l.b16 %v393
        %v439 = vunpack.c.l.b16 %v394
        %v440 = vpack.c.b16 %v425, %v424
        %v441 = vpack.c.b16 %v427, %v426
        %v442 = vpack.c.b16 %v429, %v428
        %v443 = vpack.c.b16 %v431, %v430
        %v444 = vpack.c.b16 %v433, %v432
        %v445 = vpack.c.b16 %v435, %v434
        %v446 = vpack.c.b16 %v437, %v436
        %v447 = vpack.c.b16 %v439, %v438
        %456 = vmatprep.subr.bf16.mxu0 0
        %457 = vmatpush1.bf16.msra.mxu0 %v440
        %458 = vmatprep.subr.bf16.mxu0 0
        %459 = vmatpush1.bf16.msra.mxu0 %v441
        %460 = vmatprep.subr.bf16.mxu0 0
        %461 = vmatpush1.bf16.msra.mxu0 %v442
        %462 = vmatprep.subr.bf16.mxu0 0
        %463 = vmatpush1.bf16.msra.mxu0 %v443
        %464 = vmatprep.subr.bf16.mxu0 0
        %465 = vmatpush1.bf16.msra.mxu0 %v444
        %466 = vmatprep.subr.bf16.mxu0 0
        %467 = vmatpush1.bf16.msra.mxu0 %v445
        %468 = vmatprep.subr.bf16.mxu0 0
        %469 = vmatpush1.bf16.msra.mxu0 %v446
        %470 = vmatprep.subr.bf16.mxu0 0
        %471 = vmatpush1.bf16.msra.mxu0 %v447
        %472 = vmatprep.subr.bf16.mxu0 0
        %473 = vmatpush1.bf16.msra.mxu0 0
        %474 = vmatprep.subr.bf16.mxu0 0
        %475 = vmatpush1.bf16.msra.mxu0 0
        %476 = vmatprep.subr.bf16.mxu0 0
        %477 = vmatpush1.bf16.msra.mxu0 0
        %478 = vmatprep.subr.bf16.mxu0 0
        %479 = vmatpush1.bf16.msra.mxu0 0
        %480 = vmatprep.subr.bf16.mxu0 0
        %481 = vmatpush1.bf16.msra.mxu0 0
        %482 = vmatprep.subr.bf16.mxu0 0
        %483 = vmatpush1.bf16.msra.mxu0 0
        %484 = vmatprep.subr.bf16.mxu0 0
        %485 = vmatpush1.bf16.msra.mxu0 0
        %486 = vmatprep.subr.bf16.mxu0 0
        %487 = vmatpush1.bf16.msra.mxu0 0
        %488 = vmatprep.mubr.bf16.mxu0 0
        %489 = vmatmul.mubr.bf16.gmra.mrb[0].mxu0 %v406
        %v490 = vpop.f32.mrb[0].mxu0
        %v491 = vadd.f32 %v400, %v490
        %v492 = vpop.f32.mrb[0].mxu0
        %v493 = vpop.f32.mrb[0].mxu0
        %v494 = vadd.f32 %v400, %v493
        %v495 = vpop.f32.mrb[0].mxu0
        %496 = vdwg.mxu0
        %v497 = vmax.f32 %v491, 0.0
        %v498 = vmax.f32 %v494, 0.0
        %v499 = vpack.c.bf16 %v498, %v497
        %v500 = vld [vmem:[#allocation5] sm:$0xf]
        %v501 = vld [vmem:[#allocation5 + $0x4] sm:$0xf]
        %v502 = vld [vmem:[#allocation5 + $0x8] sm:$0xf]
        %v503 = vld [vmem:[#allocation5 + $0xc] sm:$0xf]
        %v504 = vld [vmem:[#allocation5 + $0x10] sm:$0xf]
        %v505 = vld [vmem:[#allocation5 + $0x14] sm:$0xf]
        %v506 = vld [vmem:[#allocation5 + $0x18] sm:$0xf]
        %v507 = vld [vmem:[#allocation5 + $0x1c] sm:$0xf]
        %v508 = vld [vmem:[#allocation5 + $0x20] sm:$0xf]
        %v509 = vld [vmem:[#allocation5 + $0x24] sm:$0xf]
        %v510 = vld [vmem:[#allocation5 + $0x28] sm:$0xf]
        %v511 = vld [vmem:[#allocation5 + $0x2c] sm:$0xf]
        %v512 = vld [vmem:[#allocation5 + $0x30] sm:$0xf]
        %v513 = vld [vmem:[#allocation5 + $0x34] sm:$0xf]
        %v514 = vld [vmem:[#allocation5 + $0x38] sm:$0xf]
        %v515 = vld [vmem:[#allocation5 + $0x3c] sm:$0xf]
        %v516 = vld [vmem:[%s4] sm:$0x1]
        %v518 = vlaneseq
        %v519 = vshrl.u32 %v518, 7
        %v520 = vsub.s32 0, %v519
        %v521 = vrot.slane %v516, %v520
        %v539 = vunpack.c.l.b16 %v500
        %v540 = vunpack.c.l.b16 %v501
        %v541 = vunpack.c.l.b16 %v502
        %v542 = vunpack.c.l.b16 %v503
        %v543 = vunpack.c.l.b16 %v504
        %v544 = vunpack.c.l.b16 %v505
        %v545 = vunpack.c.l.b16 %v506
        %v546 = vunpack.c.l.b16 %v507
        %v547 = vunpack.c.l.b16 %v508
        %v548 = vunpack.c.l.b16 %v509
        %v549 = vunpack.c.l.b16 %v510
        %v550 = vunpack.c.l.b16 %v511
        %v551 = vunpack.c.l.b16 %v512
        %v552 = vunpack.c.l.b16 %v513
        %v553 = vunpack.c.l.b16 %v514
        %v554 = vunpack.c.l.b16 %v515
        %v555 = vpack.c.b16 %v540, %v539
        %v556 = vpack.c.b16 %v542, %v541
        %v557 = vpack.c.b16 %v544, %v543
        %v558 = vpack.c.b16 %v546, %v545
        %v559 = vpack.c.b16 %v548, %v547
        %v560 = vpack.c.b16 %v550, %v549
        %v561 = vpack.c.b16 %v552, %v551
        %v562 = vpack.c.b16 %v554, %v553
        %571 = vmatprep.subr.bf16.mxu0 0
        %572 = vmatpush1.bf16.msra.mxu0 %v555
        %573 = vmatprep.subr.bf16.mxu0 0
        %574 = vmatpush1.bf16.msra.mxu0 %v556
        %575 = vmatprep.subr.bf16.mxu0 0
        %576 = vmatpush1.bf16.msra.mxu0 %v557
        %577 = vmatprep.subr.bf16.mxu0 0
        %578 = vmatpush1.bf16.msra.mxu0 %v558
        %579 = vmatprep.subr.bf16.mxu0 0
        %580 = vmatpush1.bf16.msra.mxu0 %v559
        %581 = vmatprep.subr.bf16.mxu0 0
        %582 = vmatpush1.bf16.msra.mxu0 %v560
        %583 = vmatprep.subr.bf16.mxu0 0
        %584 = vmatpush1.bf16.msra.mxu0 %v561
        %585 = vmatprep.subr.bf16.mxu0 0
        %586 = vmatpush1.bf16.msra.mxu0 %v562
        %587 = vmatprep.subr.bf16.mxu0 0
        %588 = vmatpush1.bf16.msra.mxu0 0
        %589 = vmatprep.subr.bf16.mxu0 0
        %590 = vmatpush1.bf16.msra.mxu0 0
        %591 = vmatprep.subr.bf16.mxu0 0
        %592 = vmatpush1.bf16.msra.mxu0 0
        %593 = vmatprep.subr.bf16.mxu0 0
        %594 = vmatpush1.bf16.msra.mxu0 0
        %595 = vmatprep.subr.bf16.mxu0 0
        %596 = vmatpush1.bf16.msra.mxu0 0
        %597 = vmatprep.subr.bf16.mxu0 0
        %598 = vmatpush1.bf16.msra.mxu0 0
        %599 = vmatprep.subr.bf16.mxu0 0
        %600 = vmatpush1.bf16.msra.mxu0 0
        %601 = vmatprep.subr.bf16.mxu0 0
        %602 = vmatpush1.bf16.msra.mxu0 0
        %603 = vmatprep.mubr.bf16.mxu0 0
        %604 = vmatmul.mubr.bf16.gmra.mrb[0].mxu0 %v499
        %v605 = vpop.f32.mrb[0].mxu0
        %v606 = vadd.f32 %v521, %v605
        %v607 = vpop.f32.mrb[0].mxu0
        %v608 = vpop.f32.mrb[0].mxu0
        %v609 = vadd.f32 %v521, %v608
        %v610 = vpop.f32.mrb[0].mxu0
        %611 = vdwg.mxu0
        %v612 = vmax.f32 %v606, 0.0
        %v613 = vmax.f32 %v609, 0.0
        %v614 = vpack.c.bf16 %v613, %v612
        %v615 = vld [vmem:[#allocation7] sm:$0xf]
        %v616 = vld [vmem:[#allocation7 + $0x4] sm:$0xf]
        %v617 = vld [vmem:[#allocation7 + $0x8] sm:$0xf]
        %v618 = vld [vmem:[#allocation7 + $0xc] sm:$0xf]
        %v619 = vld [vmem:[#allocation7 + $0x10] sm:$0xf]
        %v620 = vld [vmem:[#allocation7 + $0x14] sm:$0xf]
        %v621 = vld [vmem:[#allocation7 + $0x18] sm:$0xf]
        %v622 = vld [vmem:[#allocation7 + $0x1c] sm:$0xf]
        %v623 = vld [vmem:[#allocation7 + $0x20] sm:$0xf]
        %v624 = vld [vmem:[#allocation7 + $0x24] sm:$0xf]
        %v625 = vld [vmem:[#allocation7 + $0x28] sm:$0xf]
        %v626 = vld [vmem:[#allocation7 + $0x2c] sm:$0xf]
        %v627 = vld [vmem:[#allocation7 + $0x30] sm:$0xf]
        %v628 = vld [vmem:[#allocation7 + $0x34] sm:$0xf]
        %v629 = vld [vmem:[#allocation7 + $0x38] sm:$0xf]
        %v630 = vld [vmem:[#allocation7 + $0x3c] sm:$0xf]
        %v631 = vld [vmem:[%s6] sm:$0x1]
        %v633 = vlaneseq
        %v634 = vshrl.u32 %v633, 7
        %v635 = vsub.s32 0, %v634
        %v636 = vrot.slane %v631, %v635
        %v654 = vunpack.c.l.b16 %v615
        %v655 = vunpack.c.l.b16 %v616
        %v656 = vunpack.c.l.b16 %v617
        %v657 = vunpack.c.l.b16 %v618
        %v658 = vunpack.c.l.b16 %v619
        %v659 = vunpack.c.l.b16 %v620
        %v660 = vunpack.c.l.b16 %v621
        %v661 = vunpack.c.l.b16 %v622
        %v662 = vunpack.c.l.b16 %v623
        %v663 = vunpack.c.l.b16 %v624
        %v664 = vunpack.c.l.b16 %v625
        %v665 = vunpack.c.l.b16 %v626
        %v666 = vunpack.c.l.b16 %v627
        %v667 = vunpack.c.l.b16 %v628
        %v668 = vunpack.c.l.b16 %v629
        %v669 = vunpack.c.l.b16 %v630
        %v670 = vpack.c.b16 %v655, %v654
        %v671 = vpack.c.b16 %v657, %v656
        %v672 = vpack.c.b16 %v659, %v658
        %v673 = vpack.c.b16 %v661, %v660
        %v674 = vpack.c.b16 %v663, %v662
        %v675 = vpack.c.b16 %v665, %v664
        %v676 = vpack.c.b16 %v667, %v666
        %v677 = vpack.c.b16 %v669, %v668
        %686 = vmatprep.subr.bf16.mxu0 0
        %687 = vmatpush1.bf16.msra.mxu0 %v670
        %688 = vmatprep.subr.bf16.mxu0 0
        %689 = vmatpush1.bf16.msra.mxu0 %v671
        %690 = vmatprep.subr.bf16.mxu0 0
        %691 = vmatpush1.bf16.msra.mxu0 %v672
        %692 = vmatprep.subr.bf16.mxu0 0
        %693 = vmatpush1.bf16.msra.mxu0 %v673
        %694 = vmatprep.subr.bf16.mxu0 0
        %695 = vmatpush1.bf16.msra.mxu0 %v674
        %696 = vmatprep.subr.bf16.mxu0 0
        %697 = vmatpush1.bf16.msra.mxu0 %v675
        %698 = vmatprep.subr.bf16.mxu0 0
        %699 = vmatpush1.bf16.msra.mxu0 %v676
        %700 = vmatprep.subr.bf16.mxu0 0
        %701 = vmatpush1.bf16.msra.mxu0 %v677
        %702 = vmatprep.subr.bf16.mxu0 0
        %703 = vmatpush1.bf16.msra.mxu0 0
        %704 = vmatprep.subr.bf16.mxu0 0
        %705 = vmatpush1.bf16.msra.mxu0 0
        %706 = vmatprep.subr.bf16.mxu0 0
        %707 = vmatpush1.bf16.msra.mxu0 0
        %708 = vmatprep.subr.bf16.mxu0 0
        %709 = vmatpush1.bf16.msra.mxu0 0
        %710 = vmatprep.subr.bf16.mxu0 0
        %711 = vmatpush1.bf16.msra.mxu0 0
        %712 = vmatprep.subr.bf16.mxu0 0
        %713 = vmatpush1.bf16.msra.mxu0 0
        %714 = vmatprep.subr.bf16.mxu0 0
        %715 = vmatpush1.bf16.msra.mxu0 0
        %716 = vmatprep.subr.bf16.mxu0 0
        %717 = vmatpush1.bf16.msra.mxu0 0
        %718 = vmatprep.mubr.bf16.mxu0 0
        %719 = vmatmul.mubr.bf16.gmra.mrb[0].mxu0 %v614
        %v720 = vpop.f32.mrb[0].mxu0
        %v721 = vadd.f32 %v636, %v720
        %v722 = vpop.f32.mrb[0].mxu0
        %v723 = vpop.f32.mrb[0].mxu0
        %v724 = vadd.f32 %v636, %v723
        %v725 = vpop.f32.mrb[0].mxu0
        %726 = vdwg.mxu0
        %v727 = vmax.f32 %v721, 0.0
        %v728 = vmax.f32 %v724, 0.0
        %v729 = vld [vmem:[%s7] sm:$0xff]
        %730 = vmatprep.subr.mxu0 0.0
        %731 = vmatpush1.xpose.msra.mxu0 %v727
        %732 = vmatprep.subr.mxu0 0.0
        %733 = vmatpush1.xpose.msra.mxu0 %v728
        %734 = vmatprep.subr.mxu0 0.0
        %735 = vmatpush1.xpose.msra.mxu0 0.0
        %736 = vmatprep.subr.mxu0 0.0
        %737 = vmatpush1.xpose.msra.mxu0 0.0
        %738 = vmatprep.subr.mxu0 0.0
        %739 = vmatpush1.xpose.msra.mxu0 0.0
        %740 = vmatprep.subr.mxu0 0.0
        %741 = vmatpush1.xpose.msra.mxu0 0.0
        %742 = vmatprep.subr.mxu0 0.0
        %743 = vmatpush1.xpose.msra.mxu0 0.0
        %744 = vmatprep.subr.mxu0 0.0
        %745 = vmatpush1.xpose.msra.mxu0 0.0
        %746 = vmatprep.subr.mxu0 0.0
        %747 = vmatpush1.xpose.msra.mxu0 0.0
        %748 = vmatprep.subr.mxu0 0.0
        %749 = vmatpush1.xpose.msra.mxu0 0.0
        %750 = vmatprep.subr.mxu0 0.0
        %751 = vmatpush1.xpose.msra.mxu0 0.0
        %752 = vmatprep.subr.mxu0 0.0
        %753 = vmatpush1.xpose.msra.mxu0 0.0
        %754 = vmatprep.subr.mxu0 0.0
        %755 = vmatpush1.xpose.msra.mxu0 0.0
        %756 = vmatprep.subr.mxu0 0.0
        %757 = vmatpush1.xpose.msra.mxu0 0.0
        %758 = vmatprep.subr.mxu0 0.0
        %759 = vmatpush1.xpose.msra.mxu0 0.0
        %760 = vmatprep.subr.mxu0 0.0
        %761 = vmatpush1.xpose.msra.mxu0 0.0
        %762 = vmatprep.subr.mxu0 0.0
        %763 = vmatpush1.xpose.msra.mxu0 0.0
        %764 = vmatprep.subr.mxu0 0.0
        %765 = vmatpush1.xpose.msra.mxu0 0.0
        %766 = vmatprep.subr.mxu0 0.0
        %767 = vmatpush1.xpose.msra.mxu0 0.0
        %768 = vmatprep.subr.mxu0 0.0
        %769 = vmatpush1.xpose.msra.mxu0 0.0
        %770 = vmatprep.subr.mxu0 0.0
        %771 = vmatpush1.xpose.msra.mxu0 0.0
        %772 = vmatprep.subr.mxu0 0.0
        %773 = vmatpush1.xpose.msra.mxu0 0.0
        %774 = vmatprep.subr.mxu0 0.0
        %775 = vmatpush1.xpose.msra.mxu0 0.0
        %776 = vmatprep.subr.mxu0 0.0
        %777 = vmatpush1.xpose.msra.mxu0 0.0
        %778 = vmatprep.subr.mxu0 0.0
        %779 = vmatpush1.xpose.msra.mxu0 0.0
        %780 = vmatprep.subr.mxu0 0.0
        %781 = vmatpush1.xpose.msra.mxu0 0.0
        %782 = vmatprep.subr.mxu0 0.0
        %783 = vmatpush1.xpose.msra.mxu0 0.0
        %784 = vmatprep.subr.mxu0 0.0
        %785 = vmatpush1.xpose.msra.mxu0 0.0
        %786 = vmatprep.subr.mxu0 0.0
        %787 = vmatpush1.xpose.msra.mxu0 0.0
        %788 = vmatprep.subr.mxu0 0.0
        %789 = vmatpush1.xpose.msra.mxu0 0.0
        %790 = vmatprep.subr.mxu0 0.0
        %791 = vmatpush1.xpose.msra.mxu0 0.0
        %792 = vmatprep.subr.mxu0 0.0
        %793 = vmatpush1.xpose.msra.mxu0 0.0
        %794 = vmatprep.mubr.f32.mxu0 0.0
        %795 = vmatmul.mubr.f32.gmra.mrb[0].mxu0 %v729
        %v796 = vpop.f32.mrb[0].mxu0
        %v797 = vadd.f32 0.0, %v796
        %v798 = vpop.f32.mrb[0].mxu0
        %799 = vdwg.mxu0
        %s800 = sld [smem:[#allocation2]]
        %v801 = vstv %s800
        %v802 = vadd.f32 %v797, %v801
        %vm803 = vcmask 122880
        %804 = vst.msk [vmem:[%s375] sm:$0x1] %vm803, %v802
        %p805 = scmp.lt.s32.totalorder %s23, 1
        %s806 = scalar_select %p805, %s23, 1
        %s807 = scalar_lea.vmem %s9, %s806
        // Predicated region
        $region69: #{value_network_forward.1} parent=55 // pred_check
          %p808 = pneg %p235
        $region70: #{value_network_forward.1} parent=55 // pred_check_branch
          %810 = sbr.rel (%p808) target = $region72
        $region71: #{value_network_forward.1} parent=55 // pred_region
          _
        $region72: #{value_network_forward.1} parent=55 // pred_fallthru
          _
      $region56: #{value_network_forward.1} parent=5 // pred_fallthru
        _
      %p811 = scmp.le.s32.totalorder 2, %s18
      // Predicated region
      $region73: #{value_network_forward.1} parent=5 // pred_check
        %p812 = pneg %p811
      $region74: #{value_network_forward.1} parent=5 // pred_check_branch
        %814 = sbr.rel (%p812) target = $region76
      $region75: #{value_network_forward.1} parent=5 // pred_region
        %s815 = ssub.s32 %s18, 2
        // Predicated region
        $region77: #{value_network_forward.1} parent=75 // pred_check
          %p816 = pneg %p241
        $region78: #{value_network_forward.1} parent=75 // pred_check_branch
          %818 = sbr.rel (%p816) target = $region80
        $region79: #{value_network_forward.1} parent=75 // pred_region
          %p819 = scmp.lt.s32.totalorder %s24, 1
          %s820 = scalar_select %p819, %s24, 1
          %s821 = scalar_lea.vmem %s9, %s820
        $region80: #{value_network_forward.1} parent=75 // pred_fallthru
          _
      $region76: #{value_network_forward.1} parent=5 // pred_fallthru
        _
    $region6: #{value_network_forward.1} parent=1 // loop_footer
      %s22 = sadd.s32 1, %s18
    $region7: #{value_network_forward.1} parent=1 // loop_footer_branch
      %17 = sbr.rel target = $region3
    $region8: #{value_network_forward.1} parent=1 // loop_exit
      _
    %822 = vsyncpa [#allocation4], 1
    %s823 = scalar_lea.sflag [#allocation4], 1
    %824 = vsyncpa %s823, 1
    %825 = vsyncpa [#allocation6], 1

</llo_original>
